<compile_context>
chip_gen: v7x
topology: tpu7x:2x2x1
jax: 0.10.0
libtpu: 0.0.40
codegen_flags: <defaults>
</compile_context>

<pallas_src>
import functools

import jax
import jax.numpy as jnp
from jax.experimental import pallas as pl
from jax.experimental.pallas import tpu as pltpu

OUT_PAD = 128        # lane-dense padded output width (needs >= 2*num_coeffs + 3)
SMALL_BATCH = 1024   # below this, plain fused XLA beats pallas_call fixed overhead


def _round_up(n: int, m: int) -> int:
    return ((n + m - 1) // m) * m


# --------------------------------------------------------------------------
# Kernel: h = tanh(x @ W_in + b_in); out = h @ W_out + b_out  (2 MXU matmuls)
# plus in-kernel masked metric partials (data already in vregs -> ~free).
# --------------------------------------------------------------------------
def _modular_form_kernel(x_ref, w_in_ref, b_in_ref, w_out_ref, b_out_ref,
                         out_ref, part_ref, *, batch: int, num_coeffs: int):
    tb = x_ref.shape[0]
    nc2 = 2 * num_coeffs

    x = x_ref[...].astype(jnp.bfloat16)                        # MXU-native operand
    h = jnp.tanh(                                              # bias/tanh in f32 (v5e-safe)
        jnp.dot(x, w_in_ref[...], preferred_element_type=jnp.float32) + b_in_ref[...]
    )
    out = (jnp.dot(h.astype(jnp.bfloat16), w_out_ref[...],
                   preferred_element_type=jnp.float32)
           + b_out_ref[...])                                   # [tb, 128] f32

    # Halve writeback: store bf16 (metrics below use the f32 values directly).
    out_ref[...] = out.astype(out_ref.dtype)

    # ---- metric partials (mask rows >= batch so padded rows don't bias means) ----
    row = jax.lax.broadcasted_iota(jnp.int32, (tb, 1), 0) + pl.program_id(0) * tb
    row_mask = row < batch                                     # [tb, 1]
    lane = jax.lax.broadcasted_iota(jnp.int32, (tb, OUT_PAD), 1)

    sq = jnp.where(lane < nc2, out * out, 0.0)                 # coeff lanes only
    norm_rows = jnp.sqrt(jnp.sum(sq, axis=-1, keepdims=True))  # [tb, 1]
    norm_sum = jnp.sum(jnp.where(row_mask, norm_rows, 0.0),
                       keepdims=True)                          # [1, 1]

    col_sums = jnp.sum(jnp.where(row_mask, out, 0.0),
                       axis=0, keepdims=True)                  # [1, 128]
    lane1 = jax.lax.broadcasted_iota(jnp.int32, (1, OUT_PAD), 1)
    vec = jnp.where(lane1 == nc2 + 2, norm_sum, col_sums)      # norm in spare lane
    part_ref[...] = jnp.broadcast_to(vec[None], part_ref.shape)


# --------------------------------------------------------------------------
# Parameter construction / packing
# --------------------------------------------------------------------------
def init_params(key, hidden_dim: int, num_coeffs: int):
    """Deterministic synthetic parameters (pre-transposed nn.Linear weights)."""
    k1, k2, k3, k4, k5, k6, k7, k8 = jax.random.split(key, 8)
    half = hidden_dim // 2
    scale = 0.1
    return {
        # coeff_net: Linear(H, H) -> Tanh -> Linear(H, 2*num_coeffs)
        "w1": jax.random.normal(k1, (hidden_dim, hidden_dim), jnp.float32) * scale,
        "b1": jax.random.normal(k2, (1, hidden_dim), jnp.float32) * scale,
        "w2": jax.random.normal(k3, (hidden_dim, 2 * num_coeffs), jnp.float32) * scale,
        "b2": jax.random.normal(k4, (1, 2 * num_coeffs), jnp.float32) * scale,
        # symmetry_net: Linear(H, H//2) -> Tanh -> Linear(H//2, 2)
        "w3": jax.random.normal(k5, (hidden_dim, half), jnp.float32) * scale,
        "b3": jax.random.normal(k6, (1, half), jnp.float32) * scale,
        "w4": jax.random.normal(k7, (half, 2), jnp.float32) * scale,
        "b4": jax.random.normal(k8, (1, 2), jnp.float32) * scale,
    }


def pack_params(params, hidden_dim: int, num_coeffs: int):
    """Fuse the two MLPs into one 2-matmul network with a lane-dense output."""
    half = hidden_dim // 2
    n_out = 2 * num_coeffs + 2
    if n_out + 1 > OUT_PAD:  # +1 spare lane for the in-kernel norm partial
        raise ValueError(
            f"num_coeffs={num_coeffs} needs {n_out + 1} output lanes > OUT_PAD={OUT_PAD}")

    # First layer: [W1 | W3], [b1 | b3]
    w_in = jnp.concatenate([params["w1"], params["w3"]], axis=1)   # [H, H+half]
    b_in = jnp.concatenate([params["b1"], params["b3"]], axis=1)   # [1, H+half]

    # Second layer: block-diagonal, zero-padded to 128 output lanes.
    w_out = jnp.zeros((hidden_dim + half, OUT_PAD), jnp.float32)
    w_out = w_out.at[:hidden_dim, : 2 * num_coeffs].set(params["w2"])
    w_out = w_out.at[hidden_dim:, 2 * num_coeffs : n_out].set(params["w4"])
    b_out = jnp.zeros((1, OUT_PAD), jnp.float32)
    b_out = b_out.at[:, : 2 * num_coeffs].set(params["b2"])
    b_out = b_out.at[:, 2 * num_coeffs : n_out].set(params["b4"])

    return {
        "w_in": w_in.astype(jnp.bfloat16),   # bf16 matmul operands
        "b_in": b_in,                        # f32 biases
        "w_out": w_out.astype(jnp.bfloat16),
        "b_out": b_out,
    }


# --------------------------------------------------------------------------
# Jittable Pallas core
# --------------------------------------------------------------------------
@functools.partial(jax.jit, static_argnames=("num_coeffs", "block_b"))
def _forward_core(x, packed, *, num_coeffs: int, block_b: int = 8192):
    B, H = x.shape
    Kh = packed["w_in"].shape[1]             # H + H//2
    nc2 = 2 * num_coeffs

    # Balanced tiling: minimize padding waste; >= 2 tiles when B allows so the
    # "parallel" grid axis can split across both v7x TensorCores.
    n_tiles = pl.cdiv(B, block_b)
    if B >= 16:
        n_tiles = max(n_tiles, 2)
    tb = _round_up(pl.cdiv(B, n_tiles), 8)
    n_tiles = pl.cdiv(B, tb)
    Bp = n_tiles * tb
    if Bp != B:
        x = jnp.pad(x, ((0, Bp - B), (0, 0)))

    kernel = functools.partial(_modular_form_kernel, batch=B, num_coeffs=num_coeffs)

    out, partials = pl.pallas_call(
        kernel,
        out_shape=(
            jax.ShapeDtypeStruct((Bp, OUT_PAD), jnp.bfloat16),      # padded result slab
            jax.ShapeDtypeStruct((n_tiles, 8, OUT_PAD), jnp.float32),  # per-tile partials
        ),
        grid_spec=pltpu.PrefetchScalarGridSpec(
            num_scalar_prefetch=0,
            grid=(n_tiles,),
            in_specs=[
                pl.BlockSpec((tb, H), lambda i: (i, 0)),          # x tile
                pl.BlockSpec((H, Kh), lambda i: (0, 0)),          # W_in (VMEM resident)
                pl.BlockSpec((1, Kh), lambda i: (0, 0)),          # b_in
                pl.BlockSpec((Kh, OUT_PAD), lambda i: (0, 0)),    # W_out (VMEM resident)
                pl.BlockSpec((1, OUT_PAD), lambda i: (0, 0)),     # b_out
            ],
            out_specs=[
                pl.BlockSpec((tb, OUT_PAD), lambda i: (i, 0)),
                pl.BlockSpec((1, 8, OUT_PAD), lambda i: (i, 0, 0)),
            ],
        ),
        compiler_params=pltpu.CompilerParams(
            dimension_semantics=("parallel",),   # megacore-shardable batch axis
        ),
    )(x, packed["w_in"], packed["b_in"], packed["w_out"], packed["b_out"])

    out = out[:B].astype(jnp.float32)
    real = out[:, :num_coeffs]
    imag = out[:, num_coeffs:nc2]
    q_coeffs = jax.lax.complex(real, imag)                        # [B, nc] complex64

    totals = jnp.sum(partials[:, 0, :], axis=0)                   # [128] f32
    inv_b = 1.0 / B
    metrics_vec = jnp.stack([
        totals[nc2 + 2] * inv_b,   # q_norm       (mean of row norms)
        totals[nc2] * inv_b,       # translation  (mean of sym[:, 0])
        totals[nc2 + 1] * inv_b,   # inversion    (mean of sym[:, 1])
    ])
    return q_coeffs, metrics_vec


# --------------------------------------------------------------------------
# Small-batch fused-XLA fallback (same packed weights / numerics)
# --------------------------------------------------------------------------
@functools.partial(jax.jit, static_argnames=("num_coeffs",))
def _forward_core_xla(x, packed, *, num_coeffs: int):
    nc2 = 2 * num_coeffs
    h = jnp.tanh(jnp.dot(x.astype(jnp.bfloat16), packed["w_in"],
                         preferred_element_type=jnp.float32) + packed["b_in"])
    out = (jnp.dot(h.astype(jnp.bfloat16), packed["w_out"],
                   preferred_element_type=jnp.float32) + packed["b_out"])
    real, imag = out[:, :num_coeffs], out[:, num_coeffs:nc2]
    sym = out[:, nc2:nc2 + 2]
    q_coeffs = jax.lax.complex(real, imag)
    q_norm = jnp.mean(jnp.sqrt(jnp.sum(real * real + imag * imag, axis=-1)))
    return q_coeffs, jnp.stack([q_norm, jnp.mean(sym[:, 0]), jnp.mean(sym[:, 1])])


def modular_form_forward(x, packed, *, weight: int = 2, level: int = 1,
                         num_coeffs: int = 10, block_b: int = 8192,
                         force_pallas: bool = False):
    """Equivalent of ModularFormComputer.forward -> (q_coeffs, metrics dict)."""
    B = x.shape[0]
    if force_pallas or B >= SMALL_BATCH:
        q_coeffs, metrics_vec = _forward_core(x, packed, num_coeffs=num_coeffs,
                                              block_b=block_b)
    else:
        q_coeffs, metrics_vec = _forward_core_xla(x, packed, num_coeffs=num_coeffs)
    # Single host sync for all three scalar metrics (matches .item() semantics).
    q_norm, t_mean, i_mean = (float(v) for v in jax.device_get(metrics_vec))
    metrics = {
        "weight": weight,
        "level": level,
        "q_norm": q_norm,
        "translation_param": t_mean,
        "inversion_param": i_mean,
    }
    return q_coeffs, metrics


# --------------------------------------------------------------------------
# Pure-JAX f32 reference (for correctness at bf16-operand tolerance)
# --------------------------------------------------------------------------
def _reference_forward(x, params, num_coeffs: int):
    h1 = jnp.tanh(x @ params["w1"] + params["b1"])
    coeffs = h1 @ params["w2"] + params["b2"]
    h2 = jnp.tanh(x @ params["w3"] + params["b3"])
    sym = h2 @ params["w4"] + params["b4"]
    real, imag = coeffs[:, :num_coeffs], coeffs[:, num_coeffs:]
    return jax.lax.complex(real, imag), sym


if __name__ == "__main__":
    hidden_dim = 32
    num_coeffs = 10

    key = jax.random.PRNGKey(0)
    kx, kp, kx2 = jax.random.split(key, 3)
    raw_params = init_params(kp, hidden_dim, num_coeffs)
    packed = pack_params(raw_params, hidden_dim, num_coeffs)

    # ---- Test 1: small demo batch, forced through the Pallas kernel ----
    batch = 8
    x = jax.random.normal(kx, (batch, hidden_dim), jnp.float32)
    q_coeffs, metrics = modular_form_forward(x, packed, num_coeffs=num_coeffs,
                                             force_pallas=True)
    q_coeffs = jax.block_until_ready(q_coeffs)

    assert q_coeffs.shape == (batch, num_coeffs)
    assert q_coeffs.dtype == jnp.complex64
    assert set(metrics.keys()) == {
        "weight", "level", "q_norm", "translation_param", "inversion_param"
    }

    q_ref, sym_ref = _reference_forward(x, raw_params, num_coeffs)
    assert jnp.allclose(jnp.real(q_coeffs), jnp.real(q_ref), atol=5e-2, rtol=5e-2)
    assert jnp.allclose(jnp.imag(q_coeffs), jnp.imag(q_ref), atol=5e-2, rtol=5e-2)
    q_norm_ref = float(jnp.mean(jnp.sqrt(jnp.sum(jnp.abs(q_ref) ** 2, axis=-1))))
    assert abs(metrics["q_norm"] - q_norm_ref) < 5e-2
    assert abs(metrics["translation_param"] - float(jnp.mean(sym_ref[:, 0]))) < 5e-2
    assert abs(metrics["inversion_param"] - float(jnp.mean(sym_ref[:, 1]))) < 5e-2

    # ---- Test 2: multi-tile grid with padded last tile (mask correctness) ----
    batch2 = 200
    x2 = jax.random.normal(kx2, (batch2, hidden_dim), jnp.float32)
    q2, m2 = modular_form_forward(x2, packed, num_coeffs=num_coeffs,
                                  force_pallas=True, block_b=64)
    q2 = jax.block_until_ready(q2)
    q_ref2, sym_ref2 = _reference_forward(x2, raw_params, num_coeffs)
    assert q2.shape == (batch2, num_coeffs)
    assert jnp.allclose(jnp.real(q2), jnp.real(q_ref2), atol=5e-2, rtol=5e-2)
    assert jnp.allclose(jnp.imag(q2), jnp.imag(q_ref2), atol=5e-2, rtol=5e-2)
    q_norm_ref2 = float(jnp.mean(jnp.sqrt(jnp.sum(jnp.abs(q_ref2) ** 2, axis=-1))))
    assert abs(m2["q_norm"] - q_norm_ref2) < 5e-2
    assert abs(m2["translation_param"] - float(jnp.mean(sym_ref2[:, 0]))) < 5e-2
    assert abs(m2["inversion_param"] - float(jnp.mean(sym_ref2[:, 1]))) < 5e-2

    print("KERNEL_OK")
</pallas_src>

<mosaic_0001>
module attributes {stable_mosaic.version = 11 : i64} {
  func.func @_modular_form_kernel(%arg0: i32, %arg1: memref<8x32xf32, #tpu.memory_space<vmem>>, %arg2: memref<32x48xbf16, #tpu.memory_space<vmem>>, %arg3: memref<1x48xf32, #tpu.memory_space<vmem>>, %arg4: memref<48x128xbf16, #tpu.memory_space<vmem>>, %arg5: memref<1x128xf32, #tpu.memory_space<vmem>>, %arg6: memref<8x128xbf16, #tpu.memory_space<vmem>>, %arg7: memref<1x8x128xf32, #tpu.memory_space<vmem>>) attributes {dimension_semantics = [#tpu.dimension_semantics<parallel>], iteration_bounds = array<i64: 1>, scalar_prefetch = 0 : i64, scratch_operands = 0 : i64, tpu.core_type = #tpu.core_type<tc>, window_params = [{transform_indices = @transform_0, window_bounds = array<i64: 8, 32>}, {pipeline_mode = #tpu.pipeline_mode<synchronous>, transform_indices = @transform_1, window_bounds = array<i64: 32, 48>}, {pipeline_mode = #tpu.pipeline_mode<synchronous>, transform_indices = @transform_2, window_bounds = array<i64: 1, 48>}, {pipeline_mode = #tpu.pipeline_mode<synchronous>, transform_indices = @transform_3, window_bounds = array<i64: 48, 128>}, {pipeline_mode = #tpu.pipeline_mode<synchronous>, transform_indices = @transform_4, window_bounds = array<i64: 1, 128>}, {transform_indices = @transform_5, window_bounds = array<i64: 8, 128>}, {transform_indices = @transform_6, window_bounds = array<i64: 1, 8, 128>}]} {
    %c0 = arith.constant 0 : index
    %c0_0 = arith.constant 0 : index
    %0 = vector.load %arg1[%c0, %c0_0] : memref<8x32xf32, #tpu.memory_space<vmem>>, vector<8x32xf32>
    %1 = arith.truncf %0 : vector<8x32xf32> to vector<8x32xbf16>
    %c0_1 = arith.constant 0 : index
    %c0_2 = arith.constant 0 : index
    %2 = vector.load %arg2[%c0_1, %c0_2] : memref<32x48xbf16, #tpu.memory_space<vmem>>, vector<32x48xbf16>
    %cst = arith.constant dense<0.000000e+00> : vector<8x48xf32>
    %3 = tpu.matmul %1, %2, %cst {dimension_numbers = #tpu.dot_dimension_numbers<[1], [0], [0], [1], [0, 0, 1, 1], [], []>} : vector<8x32xbf16>, vector<32x48xbf16>, vector<8x48xf32> -> vector<8x48xf32>
    %c0_3 = arith.constant 0 : index
    %c0_4 = arith.constant 0 : index
    %4 = vector.load %arg3[%c0_3, %c0_4] : memref<1x48xf32, #tpu.memory_space<vmem>>, vector<1x48xf32>
    %5 = vector.broadcast %4 : vector<1x48xf32> to vector<8x48xf32>
    %6 = arith.addf %3, %5 : vector<8x48xf32>
    %7 = math.tanh %6 : vector<8x48xf32>
    %8 = arith.truncf %7 : vector<8x48xf32> to vector<8x48xbf16>
    %c0_5 = arith.constant 0 : index
    %c0_6 = arith.constant 0 : index
    %9 = vector.load %arg4[%c0_5, %c0_6] : memref<48x128xbf16, #tpu.memory_space<vmem>>, vector<48x128xbf16>
    %cst_7 = arith.constant dense<0.000000e+00> : vector<8x128xf32>
    %10 = tpu.matmul %8, %9, %cst_7 {dimension_numbers = #tpu.dot_dimension_numbers<[1], [0], [0], [1], [0, 0, 1, 1], [], []>} : vector<8x48xbf16>, vector<48x128xbf16>, vector<8x128xf32> -> vector<8x128xf32>
    %c0_8 = arith.constant 0 : index
    %c0_9 = arith.constant 0 : index
    %11 = vector.load %arg5[%c0_8, %c0_9] : memref<1x128xf32, #tpu.memory_space<vmem>>, vector<1x128xf32>
    %12 = vector.broadcast %11 : vector<1x128xf32> to vector<8x128xf32>
    %13 = arith.addf %10, %12 : vector<8x128xf32>
    %14 = arith.truncf %13 : vector<8x128xf32> to vector<8x128xbf16>
    %c0_10 = arith.constant 0 : index
    %c0_11 = arith.constant 0 : index
    %15 = vector.load %arg6[%c0_10, %c0_11] : memref<8x128xbf16, #tpu.memory_space<vmem>>, vector<8x128xbf16>
    tpu.vector_store %arg6[%c0_10, %c0_11], %14 {strides = array<i32>} : memref<8x128xbf16, #tpu.memory_space<vmem>>, vector<8x128xbf16>,
    %16 = tpu.iota {dimensions = array<i32: 0>} : vector<8x1xi32>
    %c8_i32 = arith.constant 8 : i32
    %17 = arith.muli %arg0, %c8_i32 : i32
    %18 = vector.broadcast %17 : i32 to vector<8x1xi32>
    %19 = arith.addi %16, %18 : vector<8x1xi32>
    %c8_i32_12 = arith.constant 8 : i32
    %20 = vector.broadcast %c8_i32_12 : i32 to vector<8x1xi32>
    %21 = arith.cmpi slt, %19, %20 : vector<8x1xi32>
    %22 = tpu.iota {dimensions = array<i32: 1>} : vector<8x128xi32>
    %c20_i32 = arith.constant 20 : i32
    %23 = vector.broadcast %c20_i32 : i32 to vector<8x128xi32>
    %24 = arith.cmpi slt, %22, %23 : vector<8x128xi32>
    %25 = arith.mulf %13, %13 : vector<8x128xf32>
    %cst_13 = arith.constant 0.000000e+00 : f32
    %26 = vector.broadcast %cst_13 : f32 to vector<8x128xf32>
    %27 = arith.select %24, %25, %26 : vector<8x128xi1>, vector<8x128xf32>
    %cst_14 = arith.constant dense<0.000000e+00> : vector<8xf32>
    %28 = vector.multi_reduction <add>, %27, %cst_14 [1] : vector<8x128xf32> to vector<8xf32>
    %29 = vector.shape_cast %28 : vector<8xf32> to vector<8x1xf32>
    %30 = math.sqrt %29 : vector<8x1xf32>
    %cst_15 = arith.constant 0.000000e+00 : f32
    %31 = vector.broadcast %cst_15 : f32 to vector<8x1xf32>
    %32 = arith.select %21, %30, %31 : vector<8x1xi1>, vector<8x1xf32>
    %33 = vector.shape_cast %32 : vector<8x1xf32> to vector<1x8x1xf32>
    %cst_16 = arith.constant dense<0.000000e+00> : vector<1xf32>
    %34 = vector.multi_reduction <add>, %33, %cst_16 [1, 2] : vector<1x8x1xf32> to vector<1xf32>
    %35 = vector.shape_cast %34 : vector<1xf32> to vector<1x1x1xf32>
    %36 = vector.extract %35[0, 0, 0] : f32 from vector<1x1x1xf32>
    %37 = vector.broadcast %36 : f32 to vector<1x1xf32>
    %cst_17 = arith.constant 0.000000e+00 : f32
    %38 = vector.shape_cast %21 : vector<8x1xi1> to vector<8x1xi1>
    %39 = vector.broadcast %38 : vector<8x1xi1> to vector<8x128xi1>
    %40 = vector.broadcast %cst_17 : f32 to vector<8x128xf32>
    %41 = arith.select %39, %13, %40 : vector<8x128xi1>, vector<8x128xf32>
    %cst_18 = arith.constant dense<0.000000e+00> : vector<128xf32>
    %42 = vector.multi_reduction <add>, %41, %cst_18 [0] : vector<8x128xf32> to vector<128xf32>
    %43 = vector.shape_cast %42 : vector<128xf32> to vector<1x128xf32>
    %44 = tpu.iota {dimensions = array<i32: 1>} : vector<1x128xi32>
    %c22_i32 = arith.constant 22 : i32
    %45 = vector.broadcast %c22_i32 : i32 to vector<1x128xi32>
    %46 = arith.cmpi eq, %44, %45 : vector<1x128xi32>
    %47 = vector.shape_cast %37 : vector<1x1xf32> to vector<1x1xf32>
    %48 = vector.broadcast %47 : vector<1x1xf32> to vector<1x128xf32>
    %49 = arith.select %46, %48, %43 : vector<1x128xi1>, vector<1x128xf32>
    %50 = vector.shape_cast %49 : vector<1x128xf32> to vector<1x1x128xf32>
    %51 = vector.shape_cast %50 : vector<1x1x128xf32> to vector<1x1x128xf32>
    %52 = vector.broadcast %51 : vector<1x1x128xf32> to vector<1x8x128xf32>
    %c0_19 = arith.constant 0 : index
    %c0_20 = arith.constant 0 : index
    %c0_21 = arith.constant 0 : index
    %53 = vector.load %arg7[%c0_19, %c0_20, %c0_21] : memref<1x8x128xf32, #tpu.memory_space<vmem>>, vector<1x8x128xf32>
    tpu.vector_store %arg7[%c0_19, %c0_20, %c0_21], %52 {strides = array<i32>} : memref<1x8x128xf32, #tpu.memory_space<vmem>>, vector<1x8x128xf32>,
    return
  }
  func.func @transform_0(%arg0: i32) -> (i32, i32) {
    %c0_i32 = arith.constant 0 : i32
    %c0_i32_0 = arith.constant 0 : i32
    return %arg0, %c0_i32 : i32, i32
  }
  func.func @transform_1(%arg0: i32) -> (i32, i32) {
    %c0_i32 = arith.constant 0 : i32
    %c0_i32_0 = arith.constant 0 : i32
    %c0_i32_1 = arith.constant 0 : i32
    return %c0_i32, %c0_i32_0 : i32, i32
  }
  func.func @transform_2(%arg0: i32) -> (i32, i32) {
    %c0_i32 = arith.constant 0 : i32
    %c0_i32_0 = arith.constant 0 : i32
    %c0_i32_1 = arith.constant 0 : i32
    return %c0_i32, %c0_i32_0 : i32, i32
  }
  func.func @transform_3(%arg0: i32) -> (i32, i32) {
    %c0_i32 = arith.constant 0 : i32
    %c0_i32_0 = arith.constant 0 : i32
    %c0_i32_1 = arith.constant 0 : i32
    return %c0_i32, %c0_i32_0 : i32, i32
  }
  func.func @transform_4(%arg0: i32) -> (i32, i32) {
    %c0_i32 = arith.constant 0 : i32
    %c0_i32_0 = arith.constant 0 : i32
    %c0_i32_1 = arith.constant 0 : i32
    return %c0_i32, %c0_i32_0 : i32, i32
  }
  func.func @transform_5(%arg0: i32) -> (i32, i32) {
    %c0_i32 = arith.constant 0 : i32
    %c0_i32_0 = arith.constant 0 : i32
    return %arg0, %c0_i32 : i32, i32
  }
  func.func @transform_6(%arg0: i32) -> (i32, i32, i32) {
    %c0_i32 = arith.constant 0 : i32
    %c0_i32_0 = arith.constant 0 : i32
    %c0_i32_1 = arith.constant 0 : i32
    return %arg0, %c0_i32, %c0_i32_0 : i32, i32, i32
  }
}

</mosaic_0001>

<llo_original>
// kernel: custom-call
$region0: #{custom-call}
  %s0 = inlined_call_operand.vmem [shape: f32[8,10], index: 0, kind: input, shape index: {}]
  %s1 = inlined_call_operand.vmem [shape: f32[8,10], index: 1, kind: input, shape index: {}]
  %s2 = inlined_call_operand.hbm [shape: c64[8,10], index: 2, kind: output, shape index: {}]
  %s3 = scalar_lea.hbm %s2, 128
  $region1: #{custom-call} parent=0
    #allocation0 [shape = 's32[1]{0}', space=sflag, size = 0x4, scoped, tag = 'scoped memory for custom-call']
    %4 = vsyncpa [#allocation0], 0
    %s5 = sshll.u32 %s0, 4
    %s6 = int_to_ptr.vmem [resolvable:$true] %s5
    %8 = dma.vmem_to_hbm [thread:$0]  %s6, 128, %s2, [#allocation0]
    %9 = dma.done [#allocation0], 128
    %10 = vsyncpa [#allocation0], 1
  $region2: #{custom-call} parent=0
    #allocation1 [shape = 's32[1]{0}', space=sflag, size = 0x4, scoped, tag = 'scoped memory for custom-call']
    %11 = vsyncpa [#allocation1], 0
    %s12 = sshll.u32 %s1, 4
    %s13 = int_to_ptr.vmem [resolvable:$true] %s12
    %15 = dma.vmem_to_hbm [thread:$0]  %s13, 128, %s3, [#allocation1]
    %16 = dma.done [#allocation1], 128
    %17 = vsyncpa [#allocation1], 1

// kernel: _forward_core.1
$region0: #{_forward_core.1}
  #allocation0 [shape = 'u32[]', space=smem, size = 0x4, offset = 0x4, fixed_abs, tag = 'smem constant byte address 0x4 - core index']
  #allocation1 [shape = 'u32[144,128]{1,0:T(1,128)}', space=vmem, size = 0x12000, scoped, tag = 'internal scratch']
  %s0 = inlined_call_operand.hbm [shape: f32[8,32], index: 0, kind: input, shape index: {}]
  %s1 = inlined_call_operand.hbm [shape: bf16[32,48], index: 1, kind: input, shape index: {}]
  %s2 = inlined_call_operand.vmem [shape: f32[1,48], index: 2, kind: input, shape index: {}]
  %s3 = inlined_call_operand.hbm [shape: bf16[48,128], index: 3, kind: input, shape index: {}]
  %s4 = inlined_call_operand.vmem [shape: f32[1,128], index: 4, kind: input, shape index: {}]
  %s5 = inlined_call_operand.vmem [shape: bf16[8,128], index: 5, kind: output, shape index: {0}]
  %s6 = inlined_call_operand.vmem [shape: f32[1,8,128], index: 6, kind: output, shape index: {1}]
  %7 = xla_tuple %s5, %s6
  %s8 = sld [smem:[#allocation0]]
  $region50: #{_forward_core.1} parent=0
    _
  %s10 = ssub.s32 1, %s8
  %s11 = scalar_select 0, %s10, %s8
  $region1: #{_forward_core.1} parent=0
    #allocation2 [shape = 'u8[4096]{0}', space=vmem, size = 0x1000, scoped, tag = 'input window, operand 0, single buffered']
    #allocation3 [shape = 's32[1]{0}', space=sflag, size = 0x4, scoped, tag = 'scoped memory for _forward_core.1']
    #allocation4 [shape = 'u8[8192]{0}', space=vmem, size = 0x2000, scoped, tag = 'input window, operand 1, single buffered']
    #allocation5 [shape = 's32[1]{0}', space=sflag, size = 0x4, scoped, tag = 'scoped memory for _forward_core.1']
    #allocation6 [shape = 'u8[12288]{0}', space=vmem, size = 0x3000, scoped, tag = 'input window, operand 3, single buffered']
    %12 = vsyncpa [#allocation3], 0
    %13 = vsyncpa [#allocation5], 0
    // Predicated region
    $region2: #{_forward_core.1} parent=1 // pred_check
      _
    $region3: #{_forward_core.1} parent=1 // pred_check_branch
      %15 = sbr.rel (0) target = $region5
    $region4: #{_forward_core.1} parent=1 // pred_region
      %s17 = ssub.s32 128, 128
      %18 = vsyncadd [#allocation3], %s17
      %s20 = sshll.u32 [#allocation2], 4
      %s21 = int_to_ptr.vmem [resolvable:$true] %s20
      %23 = dma.hbm_to_vmem [thread:$0]  %s0, 128, %s21, [#allocation3]
    $region5: #{_forward_core.1} parent=1 // pred_fallthru
      _
    // Predicated region
    $region6: #{_forward_core.1} parent=1 // pred_check
      _
    $region7: #{_forward_core.1} parent=1 // pred_check_branch
      %25 = sbr.rel (0) target = $region9
    $region8: #{_forward_core.1} parent=1 // pred_region
      %s27 = ssub.s32 256, 256
      %28 = vsyncadd [#allocation5], %s27
      %s29 = sshll.u32 [#allocation4], 4
      %s30 = int_to_ptr.vmem [resolvable:$true] %s29
      %35 = dma.hbm_to_vmem [thread:$0]  %s1, 256, %s30, [#allocation5], 64, 64, 4
    $region9: #{_forward_core.1} parent=1 // pred_fallthru
      _
    // Predicated region
    $region10: #{_forward_core.1} parent=1 // pred_check
      _
    $region11: #{_forward_core.1} parent=1 // pred_check_branch
      %37 = sbr.rel (0) target = $region13
    $region12: #{_forward_core.1} parent=1 // pred_region
      _
    $region13: #{_forward_core.1} parent=1 // pred_fallthru
      _
    // Predicated region
    $region14: #{_forward_core.1} parent=1 // pred_check
      _
    $region15: #{_forward_core.1} parent=1 // pred_check_branch
      %39 = sbr.rel (0) target = $region17
    $region16: #{_forward_core.1} parent=1 // pred_region
      %s41 = ssub.s32 384, 384
      %42 = vsyncadd [#allocation5], %s41
      %s43 = sshll.u32 [#allocation6], 4
      %s44 = int_to_ptr.vmem [resolvable:$true] %s43
      %49 = dma.hbm_to_vmem [thread:$0]  %s3, 384, %s44, [#allocation5], 64, 64, 4
    $region17: #{_forward_core.1} parent=1 // pred_fallthru
      _
    // Predicated region
    $region18: #{_forward_core.1} parent=1 // pred_check
      _
    $region19: #{_forward_core.1} parent=1 // pred_check_branch
      %51 = sbr.rel (0) target = $region21
    $region20: #{_forward_core.1} parent=1 // pred_region
      _
    $region21: #{_forward_core.1} parent=1 // pred_fallthru
      _
    // Predicated region
    $region22: #{_forward_core.1} parent=1 // pred_check
      _
    $region23: #{_forward_core.1} parent=1 // pred_check_branch
      %53 = sbr.rel (0) target = $region25
    $region24: #{_forward_core.1} parent=1 // pred_region
      %54 = dma.done [#allocation3], 128
    $region25: #{_forward_core.1} parent=1 // pred_fallthru
      _
    // Predicated region
    $region26: #{_forward_core.1} parent=1 // pred_check
      _
    $region27: #{_forward_core.1} parent=1 // pred_check_branch
      %56 = sbr.rel (0) target = $region29
    $region28: #{_forward_core.1} parent=1 // pred_region
      %57 = dma.done [#allocation5], 256
    $region29: #{_forward_core.1} parent=1 // pred_fallthru
      _
    // Predicated region
    $region30: #{_forward_core.1} parent=1 // pred_check
      _
    $region31: #{_forward_core.1} parent=1 // pred_check_branch
      %59 = sbr.rel (0) target = $region33
    $region32: #{_forward_core.1} parent=1 // pred_region
      %60 = dma.done [#allocation5], 384
    $region33: #{_forward_core.1} parent=1 // pred_fallthru
      _
    %v62 = vld [vmem:[#allocation2] sm:$0xff]
    %v63 = vpack.c.bf16 %v62, %v62
    %v64 = vld [vmem:[#allocation4] sm:$0xf]
    %v65 = vld [vmem:[#allocation4 + $0x4] sm:$0xf]
    %v66 = vld [vmem:[#allocation4 + $0x8] sm:$0xf]
    %v67 = vld [vmem:[#allocation4 + $0xc] sm:$0xf]
    %v68 = vld [vmem:[%s2] sm:$0x1]
    %v70 = vlaneseq
    %v71 = vshrl.u32 %v70, 7
    %v72 = vsub.s32 0, %v71
    %v73 = vrot.slane %v68, %v72
    %v79 = vunpack.c.l.b16 %v64
    %v80 = vunpack.c.l.b16 %v65
    %v81 = vunpack.c.l.b16 %v66
    %v82 = vunpack.c.l.b16 %v67
    %v83 = vpack.c.b16 %v80, %v79
    %v84 = vpack.c.b16 %v82, %v81
    %vm87 = vcmask 261120
    %v89 = vsel %vm87, %v63, 0
    %91 = vmatprep.subr.bf16.mxu0 0
    %92 = vmatpush1.bf16.msra.mxu0 %v83
    %93 = vmatprep.subr.bf16.mxu0 0
    %94 = vmatpush1.bf16.msra.mxu0 %v84
    %95 = vmatprep.subr.bf16.mxu0 0
    %96 = vmatpush1.bf16.msra.mxu0 0
    %97 = vmatprep.subr.bf16.mxu0 0
    %98 = vmatpush1.bf16.msra.mxu0 0
    %99 = vmatprep.subr.bf16.mxu0 0
    %100 = vmatpush1.bf16.msra.mxu0 0
    %101 = vmatprep.subr.bf16.mxu0 0
    %102 = vmatpush1.bf16.msra.mxu0 0
    %103 = vmatprep.subr.bf16.mxu0 0
    %104 = vmatpush1.bf16.msra.mxu0 0
    %105 = vmatprep.subr.bf16.mxu0 0
    %106 = vmatpush1.bf16.msra.mxu0 0
    %107 = vmatprep.subr.bf16.mxu0 0
    %108 = vmatpush1.bf16.msra.mxu0 0
    %109 = vmatprep.subr.bf16.mxu0 0
    %110 = vmatpush1.bf16.msra.mxu0 0
    %111 = vmatprep.subr.bf16.mxu0 0
    %112 = vmatpush1.bf16.msra.mxu0 0
    %113 = vmatprep.subr.bf16.mxu0 0
    %114 = vmatpush1.bf16.msra.mxu0 0
    %115 = vmatprep.subr.bf16.mxu0 0
    %116 = vmatpush1.bf16.msra.mxu0 0
    %117 = vmatprep.subr.bf16.mxu0 0
    %118 = vmatpush1.bf16.msra.mxu0 0
    %119 = vmatprep.subr.bf16.mxu0 0
    %120 = vmatpush1.bf16.msra.mxu0 0
    %121 = vmatprep.subr.bf16.mxu0 0
    %122 = vmatpush1.bf16.msra.mxu0 0
    %123 = vmatprep.mubr.bf16.mxu0 0
    %124 = vmatmul.mubr.bf16.gmra.mrb[0].mxu0 %v89
    %v125 = vpop.f32.mrb[0].mxu0
    %v126 = vadd.f32 %v73, %v125
    %v127 = vpop.f32.mrb[0].mxu0
    %v128 = vpop.f32.mrb[0].mxu0
    %v129 = vpop.f32.mrb[0].mxu0
    %130 = vdwg.mxu0
    %v131 = vtanh.pop %v126
    %v132 = vpack.c.bf16 %v131, %v131
    %v133 = vld [vmem:[#allocation6] sm:$0xf]
    %v134 = vld [vmem:[#allocation6 + $0x4] sm:$0xf]
    %v135 = vld [vmem:[#allocation6 + $0x8] sm:$0xf]
    %v136 = vld [vmem:[#allocation6 + $0xc] sm:$0xf]
    %v137 = vld [vmem:[#allocation6 + $0x10] sm:$0xf]
    %v138 = vld [vmem:[#allocation6 + $0x14] sm:$0xf]
    %v139 = vld [vmem:[%s4] sm:$0x1]
    %v141 = vlaneseq
    %v142 = vshrl.u32 %v141, 7
    %v143 = vsub.s32 0, %v142
    %v144 = vrot.slane %v139, %v143
    %v152 = vunpack.c.l.b16 %v133
    %v153 = vunpack.c.l.b16 %v134
    %v154 = vunpack.c.l.b16 %v135
    %v155 = vunpack.c.l.b16 %v136
    %v156 = vunpack.c.l.b16 %v137
    %v157 = vunpack.c.l.b16 %v138
    %v158 = vpack.c.b16 %v153, %v152
    %v159 = vpack.c.b16 %v155, %v154
    %v160 = vpack.c.b16 %v157, %v156
    %vm164 = vcmask 392192
    %v166 = vsel %vm164, %v132, 0
    %168 = vmatprep.subr.bf16.mxu0 0
    %169 = vmatpush1.bf16.msra.mxu0 %v158
    %170 = vmatprep.subr.bf16.mxu0 0
    %171 = vmatpush1.bf16.msra.mxu0 %v159
    %172 = vmatprep.subr.bf16.mxu0 0
    %173 = vmatpush1.bf16.msra.mxu0 %v160
    %174 = vmatprep.subr.bf16.mxu0 0
    %175 = vmatpush1.bf16.msra.mxu0 0
    %176 = vmatprep.subr.bf16.mxu0 0
    %177 = vmatpush1.bf16.msra.mxu0 0
    %178 = vmatprep.subr.bf16.mxu0 0
    %179 = vmatpush1.bf16.msra.mxu0 0
    %180 = vmatprep.subr.bf16.mxu0 0
    %181 = vmatpush1.bf16.msra.mxu0 0
    %182 = vmatprep.subr.bf16.mxu0 0
    %183 = vmatpush1.bf16.msra.mxu0 0
    %184 = vmatprep.subr.bf16.mxu0 0
    %185 = vmatpush1.bf16.msra.mxu0 0
    %186 = vmatprep.subr.bf16.mxu0 0
    %187 = vmatpush1.bf16.msra.mxu0 0
    %188 = vmatprep.subr.bf16.mxu0 0
    %189 = vmatpush1.bf16.msra.mxu0 0
    %190 = vmatprep.subr.bf16.mxu0 0
    %191 = vmatpush1.bf16.msra.mxu0 0
    %192 = vmatprep.subr.bf16.mxu0 0
    %193 = vmatpush1.bf16.msra.mxu0 0
    %194 = vmatprep.subr.bf16.mxu0 0
    %195 = vmatpush1.bf16.msra.mxu0 0
    %196 = vmatprep.subr.bf16.mxu0 0
    %197 = vmatpush1.bf16.msra.mxu0 0
    %198 = vmatprep.subr.bf16.mxu0 0
    %199 = vmatpush1.bf16.msra.mxu0 0
    %200 = vmatprep.mubr.bf16.mxu0 0
    %201 = vmatmul.mubr.bf16.gmra.mrb[0].mxu0 %v166
    %v202 = vpop.f32.mrb[0].mxu0
    %v203 = vadd.f32 %v144, %v202
    %v204 = vpop.f32.mrb[0].mxu0
    %v205 = vpop.f32.mrb[0].mxu0
    %v206 = vpop.f32.mrb[0].mxu0
    %207 = vdwg.mxu0
    %v208 = vpack.c.bf16 %v203, %v203
    %209 = vst [vmem:[%s5] sm:$0xf] %v208
    %v210 = vlaneseq
    %v211 = vshrl.u32 %v210, 7
    %s212 = smul.u32 0, 8
    %v213 = vstv %s212
    %v214 = vadd.s32 %v211, %v213
    %vm215 = vcmp.lt.s32.totalorder %v214, 8
    %v216 = vlaneseq
    %v217 = vand.u32 %v216, 127
    %vm218 = vcmp.lt.s32.totalorder %v217, 20
    %v219 = vmul.f32 %v203, %v203
    %v220 = vsel %vm218, %v219, 0.0
    %221 = vadd.xlane.f32.xlu0 %v220
    %v222 = vpop.xlane.xlu0 %221
    %v223 = vrsqrt.pop %v222
    %v224 = vmul.f32 %v222, %v223
    %vm225 = vcmp.eq.f32.partialorder %v222, inf
    %v226 = vsel %vm225, %v222, %v224
    %vm227 = vcmp.eq.f32.partialorder %v222, 0.0
    %v228 = vand.u32 %v222, 2147483648
    %v229 = vsel %vm227, %v228, %v226
    %v230 = vsel %vm215, %v229, 0.0
    %vm231 = vcmask 7168
    %v232 = vsel %vm231, %v230, 0.0
    %233 = vadd.xlane.f32.xlu0 %v232
    %v234 = vpop.xlane.xlu0 %233
    %v235 = vrot.slane %v234, 4
    %v236 = vadd.f32 %v234, %v235
    %v237 = vrot.slane %v236, 2
    %v238 = vadd.f32 %v236, %v237
    %v239 = vrot.slane %v238, 1
    %v240 = vadd.f32 %v238, %v239
    %s241 = vtos %v240
    %v242 = vsel %vm215, 1, 0
    %vm243 = vcmp.eq.s32.totalorder %v242, 1
    %v244 = vsel %vm243, %v203, 0.0
    %v245 = vrot.slane %v244, 4
    %v246 = vadd.f32 %v244, %v245
    %v247 = vrot.slane %v246, 2
    %v248 = vadd.f32 %v246, %v247
    %v249 = vrot.slane %v248, 1
    %v250 = vadd.f32 %v248, %v249
    %vm251 = vcmp.eq.s32.totalorder %v217, 22
    %v252 = vstv %s241
    %v253 = vsel %vm251, %v252, %v250
    %254 = vst [vmem:[%s6] sm:$0xff] %v253
    // Predicated region
    $region34: #{_forward_core.1} parent=1 // pred_check
      _
    $region35: #{_forward_core.1} parent=1 // pred_check_branch
      %256 = sbr.rel (0) target = $region37
    $region36: #{_forward_core.1} parent=1 // pred_region
      _
    $region37: #{_forward_core.1} parent=1 // pred_fallthru
      _
    // Predicated region
    $region38: #{_forward_core.1} parent=1 // pred_check
      _
    $region39: #{_forward_core.1} parent=1 // pred_check_branch
      %258 = sbr.rel (0) target = $region41
    $region40: #{_forward_core.1} parent=1 // pred_region
      _
    $region41: #{_forward_core.1} parent=1 // pred_fallthru
      _
    // Predicated region
    $region42: #{_forward_core.1} parent=1 // pred_check
      _
    $region43: #{_forward_core.1} parent=1 // pred_check_branch
      %260 = sbr.rel (0) target = $region45
    $region44: #{_forward_core.1} parent=1 // pred_region
      _
    $region45: #{_forward_core.1} parent=1 // pred_fallthru
      _
    // Predicated region
    $region46: #{_forward_core.1} parent=1 // pred_check
      _
    $region47: #{_forward_core.1} parent=1 // pred_check_branch
      %262 = sbr.rel (0) target = $region49
    $region48: #{_forward_core.1} parent=1 // pred_region
      _
    $region49: #{_forward_core.1} parent=1 // pred_fallthru
      _
    %263 = vsyncpa [#allocation3], 1
    %264 = vsyncpa [#allocation5], 1

</llo_original>
